<compile_context>
chip_gen: v5e
topology: v5e:2x2
jax: 0.10.0
libtpu: 0.0.40
codegen_flags: <defaults>
</compile_context>

<pallas_src>
import functools
import math

import jax
import jax.numpy as jnp
from jax.experimental import pallas as pl
from jax.experimental.pallas import tpu as pltpu

# Explicit scoped-VMEM limit: safe on every generation (v5e/v6e physical 128 MiB,
# v7x physical 64 MiB; scoped defaults are 16/32/32 MiB).
_VMEM_LIMIT_BYTES = 32 * 1024 * 1024
# Budget for the double-buffered x/out pipeline blocks + in-kernel f32 temporaries.
_TILE_VMEM_BUDGET = 20 * 1024 * 1024


def _round_up(x: int, m: int) -> int:
    return int(pl.cdiv(x, m) * m)


def _sublane_multiple(itemsize: int) -> int:
    # 8 for f32, 16 for bf16, 32 for int8/fp8 (packed sublanes).
    return max(8, 32 // max(itemsize, 1))


def _bytes_per_slice(feat: int, itemsize: int) -> int:
    # 2x double-buffered input block + 2x double-buffered output block (native
    # dtype) + ~2 f32 temporaries inside the kernel body, per row/column.
    return feat * (4 * itemsize + 2 * 4)


def _pick_row_tile(rows: int, feat: int, itemsize: int) -> int:
    m = _sublane_multiple(itemsize)
    tile = _TILE_VMEM_BUDGET // max(_bytes_per_slice(feat, itemsize), 1)
    tile = max(m, min(2048, (tile // m) * m))
    return int(min(tile, _round_up(rows, m)))


def _pick_col_tile(rows: int, feat: int, itemsize: int) -> int:
    tile = _TILE_VMEM_BUDGET // max(_bytes_per_slice(feat, itemsize), 1)
    tile = max(128, min(4096, (tile // 128) * 128))
    return int(min(tile, _round_up(rows, 128)))


# ---------------------------------------------------------------------------
# Kernels
# ---------------------------------------------------------------------------
def _ln_rows_kernel(x_ref, a_ref, b_ref, o_ref, *, eps: float):
    """Feature on the lane axis: x block = (row_tile, F), normalize over axis -1."""
    x = x_ref[...].astype(jnp.float32)            # (T, F)
    a = a_ref[...].astype(jnp.float32)            # (1, F)
    b = b_ref[...].astype(jnp.float32)            # (1, F)

    n = x.shape[-1]
    # Fused single pass: the two reductions are independent and pipeline on the XLU.
    s1 = jnp.sum(x, axis=-1, keepdims=True)       # (T, 1)
    s2 = jnp.sum(x * x, axis=-1, keepdims=True)   # (T, 1)
    mean = s1 * jnp.float32(1.0 / n)
    # Unbiased variance (torch.std default). n == 1 gives 0/0 = nan, like torch.
    var = (s2 - s1 * mean) / jnp.float32(n - 1)
    std = jnp.sqrt(jnp.maximum(var, 0.0))
    # Per-row reciprocal on the EUP instead of a (T, F) broadcast VALU divide.
    # (approx=True would be cheaper still but costs a few digits of accuracy.)
    inv = pl.reciprocal(std + jnp.float32(eps), approx=False)   # (T, 1)

    o_ref[...] = ((x - mean) * inv * a + b).astype(o_ref.dtype)


def _ln_cols_kernel(x_ref, a_ref, b_ref, o_ref, *, eps: float):
    """Lane-dense layout for small feature dims: x block = (F, col_tile);
    rows live on the 128-lane axis, normalize over axis 0 (sublanes)."""
    x = x_ref[...].astype(jnp.float32)            # (F, T)
    a = a_ref[...].astype(jnp.float32)            # (F, 1)
    b = b_ref[...].astype(jnp.float32)            # (F, 1)

    n = x.shape[0]
    s1 = jnp.sum(x, axis=0, keepdims=True)        # (1, T)
    s2 = jnp.sum(x * x, axis=0, keepdims=True)    # (1, T)
    mean = s1 * jnp.float32(1.0 / n)
    var = (s2 - s1 * mean) / jnp.float32(n - 1)
    std = jnp.sqrt(jnp.maximum(var, 0.0))
    inv = pl.reciprocal(std + jnp.float32(eps), approx=False)   # (1, T)

    o_ref[...] = ((x - mean) * inv * a + b).astype(o_ref.dtype)


# ---------------------------------------------------------------------------
# Wrappers
# ---------------------------------------------------------------------------
def _ln_rows(x2, a_2, b_2, eps):
    rows, feat = x2.shape
    itemsize = jnp.dtype(x2.dtype).itemsize
    row_tile = _pick_row_tile(rows, feat, itemsize)
    rows_p = _round_up(rows, row_tile)
    if rows_p != rows:
        # Pad rows instead of collapsing the grid; padded rows compute b_2 and
        # are sliced off below (no nan: eps keeps the denominator positive).
        x2 = jnp.pad(x2, ((0, rows_p - rows), (0, 0)))
    grid = (rows_p // row_tile,)

    out = pl.pallas_call(
        functools.partial(_ln_rows_kernel, eps=eps),
        out_shape=jax.ShapeDtypeStruct((rows_p, feat), x2.dtype),
        grid_spec=pltpu.PrefetchScalarGridSpec(
            num_scalar_prefetch=0,
            grid=grid,
            in_specs=[
                pl.BlockSpec((row_tile, feat), lambda i: (i, 0)),
                pl.BlockSpec((1, feat), lambda i: (0, 0)),
                pl.BlockSpec((1, feat), lambda i: (0, 0)),
            ],
            out_specs=pl.BlockSpec((row_tile, feat), lambda i: (i, 0)),
        ),
        compiler_params=pltpu.CompilerParams(
            dimension_semantics=("parallel",),
            vmem_limit_bytes=_VMEM_LIMIT_BYTES,
        ),
        cost_estimate=pl.CostEstimate(
            flops=8 * rows_p * feat,
            transcendentals=2 * rows_p,
            bytes_accessed=2 * rows_p * feat * itemsize,
        ),
    )(x2, a_2.reshape(1, feat), b_2.reshape(1, feat))

    return out[:rows] if rows_p != rows else out


def _ln_cols(x2, a_2, b_2, eps):
    rows, feat = x2.shape
    itemsize = jnp.dtype(x2.dtype).itemsize
    col_tile = _pick_col_tile(rows, feat, itemsize)
    cols_p = _round_up(rows, col_tile)
    xt = x2.T                                     # (feat, rows): rows on the lane axis
    if cols_p != rows:
        xt = jnp.pad(xt, ((0, 0), (0, cols_p - rows)))
    grid = (cols_p // col_tile,)

    out = pl.pallas_call(
        functools.partial(_ln_cols_kernel, eps=eps),
        out_shape=jax.ShapeDtypeStruct((feat, cols_p), x2.dtype),
        grid_spec=pltpu.PrefetchScalarGridSpec(
            num_scalar_prefetch=0,
            grid=grid,
            in_specs=[
                pl.BlockSpec((feat, col_tile), lambda i: (0, i)),
                pl.BlockSpec((feat, 1), lambda i: (0, 0)),
                pl.BlockSpec((feat, 1), lambda i: (0, 0)),
            ],
            out_specs=pl.BlockSpec((feat, col_tile), lambda i: (0, i)),
        ),
        compiler_params=pltpu.CompilerParams(
            dimension_semantics=("parallel",),
            vmem_limit_bytes=_VMEM_LIMIT_BYTES,
        ),
        cost_estimate=pl.CostEstimate(
            flops=8 * cols_p * feat,
            transcendentals=2 * cols_p,
            bytes_accessed=2 * cols_p * feat * itemsize,
        ),
    )(xt, a_2.reshape(feat, 1), b_2.reshape(feat, 1))

    out = out[:, :rows] if cols_p != rows else out
    return out.T


def layer_norm(x: jax.Array, a_2: jax.Array, b_2: jax.Array,
               eps: float = 1e-6) -> jax.Array:
    """LayerNorm over the last axis of x, matching the PyTorch module."""
    orig_shape = x.shape
    feat = orig_shape[-1]
    assert a_2.shape == (feat,) and b_2.shape == (feat,)
    rows = int(math.prod(orig_shape[:-1]))
    x2 = x.reshape(rows, feat)

    if feat >= 128:
        out2 = _ln_rows(x2, a_2, b_2, eps)
    else:
        # Tiny feature dim: run in the transposed lane-dense layout so stores
        # use all 128 lanes instead of masked partial stores.
        out2 = _ln_cols(x2, a_2, b_2, eps)
    return out2.reshape(orig_shape)


def _reference(x, a_2, b_2, eps):
    mean = jnp.mean(x, axis=-1, keepdims=True)
    std = jnp.std(x, axis=-1, keepdims=True, ddof=1)   # unbiased, like torch.std
    return a_2 * (x - mean) / (std + eps) + b_2


if __name__ == "__main__":
    key = jax.random.PRNGKey(0)
    k_small, k_big, k_a, k_b = jax.random.split(key, 4)

    # Shapes implied by the module: (batch, seq, hidden), normalize over hidden.
    batch, seq, hidden = 2, 8, 32
    x = jax.random.normal(k_small, (batch, seq, hidden), dtype=jnp.float32)
    a_2 = jnp.ones((hidden,), dtype=jnp.float32)     # nn.Parameter(torch.ones(feature))
    b_2 = jnp.zeros((hidden,), dtype=jnp.float32)    # nn.Parameter(torch.zeros(feature))

    out = jax.block_until_ready(layer_norm(x, a_2, b_2, eps=1e-6))
    ref = _reference(x, a_2, b_2, 1e-6)
    assert jnp.allclose(out, ref, atol=1e-5, rtol=1e-5), "mismatch (feat<128 path)"

    # Also exercise the feature>=128 path (feature on the lane axis) with
    # non-trivial gamma/beta and a row count that is not a tile multiple.
    hidden2 = 256
    x_big = jax.random.normal(k_big, (3, 7, hidden2), dtype=jnp.float32)
    a_big = jax.random.normal(k_a, (hidden2,), dtype=jnp.float32)
    b_big = jax.random.normal(k_b, (hidden2,), dtype=jnp.float32)
    out_big = jax.block_until_ready(layer_norm(x_big, a_big, b_big, eps=1e-6))
    ref_big = _reference(x_big, a_big, b_big, 1e-6)
    assert jnp.allclose(out_big, ref_big, atol=1e-5, rtol=1e-5), "mismatch (feat>=128 path)"

    print("KERNEL_OK")
</pallas_src>

<mosaic_0001>
module attributes {stable_mosaic.version = 11 : i64} {
  func.func @_ln_cols_kernel(%arg0: i32, %arg1: memref<32x128xf32, #tpu.memory_space<vmem>>, %arg2: memref<32x1xf32, #tpu.memory_space<vmem>>, %arg3: memref<32x1xf32, #tpu.memory_space<vmem>>, %arg4: memref<32x128xf32, #tpu.memory_space<vmem>>) attributes {dimension_semantics = [#tpu.dimension_semantics<parallel>], iteration_bounds = array<i64: 1>, scalar_prefetch = 0 : i64, scratch_operands = 0 : i64, tpu.core_type = #tpu.core_type<tc>, window_params = [{transform_indices = @transform_0, window_bounds = array<i64: 32, 128>}, {pipeline_mode = #tpu.pipeline_mode<synchronous>, transform_indices = @transform_1, window_bounds = array<i64: 32, 1>}, {pipeline_mode = #tpu.pipeline_mode<synchronous>, transform_indices = @transform_2, window_bounds = array<i64: 32, 1>}, {transform_indices = @transform_3, window_bounds = array<i64: 32, 128>}]} {
    %c0 = arith.constant 0 : index
    %c0_0 = arith.constant 0 : index
    %0 = vector.load %arg1[%c0, %c0_0] : memref<32x128xf32, #tpu.memory_space<vmem>>, vector<32x128xf32>
    %c0_1 = arith.constant 0 : index
    %c0_2 = arith.constant 0 : index
    %1 = vector.load %arg2[%c0_1, %c0_2] : memref<32x1xf32, #tpu.memory_space<vmem>>, vector<32x1xf32>
    %c0_3 = arith.constant 0 : index
    %c0_4 = arith.constant 0 : index
    %2 = vector.load %arg3[%c0_3, %c0_4] : memref<32x1xf32, #tpu.memory_space<vmem>>, vector<32x1xf32>
    %cst = arith.constant dense<0.000000e+00> : vector<128xf32>
    %3 = vector.multi_reduction <add>, %0, %cst [0] : vector<32x128xf32> to vector<128xf32>
    %4 = vector.shape_cast %3 : vector<128xf32> to vector<1x128xf32>
    %5 = arith.mulf %0, %0 : vector<32x128xf32>
    %cst_5 = arith.constant dense<0.000000e+00> : vector<128xf32>
    %6 = vector.multi_reduction <add>, %5, %cst_5 [0] : vector<32x128xf32> to vector<128xf32>
    %7 = vector.shape_cast %6 : vector<128xf32> to vector<1x128xf32>
    %cst_6 = arith.constant 3.125000e-02 : f32
    %8 = vector.broadcast %cst_6 : f32 to vector<1x128xf32>
    %9 = arith.mulf %4, %8 : vector<1x128xf32>
    %10 = arith.mulf %4, %9 : vector<1x128xf32>
    %11 = arith.subf %7, %10 : vector<1x128xf32>
    %cst_7 = arith.constant 3.100000e+01 : f32
    %12 = vector.broadcast %cst_7 : f32 to vector<1x128xf32>
    %13 = arith.divf %11, %12 : vector<1x128xf32>
    %cst_8 = arith.constant 0.000000e+00 : f32
    %14 = vector.broadcast %cst_8 : f32 to vector<1x128xf32>
    %15 = arith.maximumf %13, %14 : vector<1x128xf32>
    %16 = math.sqrt %15 : vector<1x128xf32>
    %cst_9 = arith.constant 9.99999997E-7 : f32
    %17 = vector.broadcast %cst_9 : f32 to vector<1x128xf32>
    %18 = arith.addf %16, %17 : vector<1x128xf32>
    %19 = tpu.reciprocal %18 : vector<1x128xf32> -> vector<1x128xf32>
    %20 = vector.broadcast %9 : vector<1x128xf32> to vector<32x128xf32>
    %21 = arith.subf %0, %20 : vector<32x128xf32>
    %22 = vector.broadcast %19 : vector<1x128xf32> to vector<32x128xf32>
    %23 = arith.mulf %21, %22 : vector<32x128xf32>
    %24 = vector.broadcast %1 : vector<32x1xf32> to vector<32x128xf32>
    %25 = arith.mulf %23, %24 : vector<32x128xf32>
    %26 = vector.broadcast %2 : vector<32x1xf32> to vector<32x128xf32>
    %27 = arith.addf %25, %26 : vector<32x128xf32>
    %c0_10 = arith.constant 0 : index
    %c0_11 = arith.constant 0 : index
    %28 = vector.load %arg4[%c0_10, %c0_11] : memref<32x128xf32, #tpu.memory_space<vmem>>, vector<32x128xf32>
    tpu.vector_store %arg4[%c0_10, %c0_11], %27 {strides = array<i32>} : memref<32x128xf32, #tpu.memory_space<vmem>>, vector<32x128xf32>,
    return
  }
  func.func @transform_0(%arg0: i32) -> (i32, i32) {
    %c0_i32 = arith.constant 0 : i32
    %c0_i32_0 = arith.constant 0 : i32
    return %c0_i32, %arg0 : i32, i32
  }
  func.func @transform_1(%arg0: i32) -> (i32, i32) {
    %c0_i32 = arith.constant 0 : i32
    %c0_i32_0 = arith.constant 0 : i32
    %c0_i32_1 = arith.constant 0 : i32
    return %c0_i32, %c0_i32_0 : i32, i32
  }
  func.func @transform_2(%arg0: i32) -> (i32, i32) {
    %c0_i32 = arith.constant 0 : i32
    %c0_i32_0 = arith.constant 0 : i32
    %c0_i32_1 = arith.constant 0 : i32
    return %c0_i32, %c0_i32_0 : i32, i32
  }
  func.func @transform_3(%arg0: i32) -> (i32, i32) {
    %c0_i32 = arith.constant 0 : i32
    %c0_i32_0 = arith.constant 0 : i32
    return %c0_i32, %arg0 : i32, i32
  }
}

</mosaic_0001>

<llo_original>
// kernel: tpu_custom_call.1
$region0: #{tpu_custom_call.1}
  #allocation0 [shape = 'u32[]', space=smem, size = 0x4, offset = 0x4, fixed_abs, tag = 'smem constant byte address 0x4 - core index']
  #allocation1 [shape = 'u32[72,128]{1,0:T(1,128)}', space=vmem, size = 0x9000, scoped, tag = 'internal scratch']
  %s0 = inlined_call_operand.vmem [shape: f32[32,128], index: 0, kind: input, shape index: {}]
  %s1 = inlined_call_operand.vmem [shape: f32[32,1], index: 1, kind: input, shape index: {}]
  %s2 = inlined_call_operand.vmem [shape: f32[32,1], index: 2, kind: input, shape index: {}]
  %s3 = inlined_call_operand.hbm [shape: f32[32,128], index: 3, kind: output, shape index: {}]
  %s4 = sld [smem:[#allocation0]]
  $region22: #{tpu_custom_call.1} parent=0
    _
  %s6 = ssub.s32 1, %s4
  %s7 = scalar_select 0, %s6, %s4
  $region1: #{tpu_custom_call.1} parent=0
    #allocation2 [shape = 'u8[16384]{0}', space=vmem, size = 0x4000, scoped, tag = 'output window, operand 0, single buffered']
    #allocation3 [shape = 's32[1]{0}', space=sflag, size = 0x4, scoped, tag = 'scoped memory for tpu_custom_call.1']
    %8 = vsyncpa [#allocation3], 0
    // Predicated region
    $region2: #{tpu_custom_call.1} parent=1 // pred_check
      _
    $region3: #{tpu_custom_call.1} parent=1 // pred_check_branch
      %10 = sbr.rel (0) target = $region5
    $region4: #{tpu_custom_call.1} parent=1 // pred_region
      _
    $region5: #{tpu_custom_call.1} parent=1 // pred_fallthru
      _
    // Predicated region
    $region6: #{tpu_custom_call.1} parent=1 // pred_check
      _
    $region7: #{tpu_custom_call.1} parent=1 // pred_check_branch
      %12 = sbr.rel (0) target = $region9
    $region8: #{tpu_custom_call.1} parent=1 // pred_region
      _
    $region9: #{tpu_custom_call.1} parent=1 // pred_fallthru
      _
    // Predicated region
    $region10: #{tpu_custom_call.1} parent=1 // pred_check
      _
    $region11: #{tpu_custom_call.1} parent=1 // pred_check_branch
      %14 = sbr.rel (0) target = $region13
    $region12: #{tpu_custom_call.1} parent=1 // pred_region
      _
    $region13: #{tpu_custom_call.1} parent=1 // pred_fallthru
      _
    %v15 = vld [vmem:[%s0] sm:$0xff]
    %v16 = vld [vmem:[%s0 + $0x8] sm:$0xff]
    %v17 = vld [vmem:[%s0 + $0x10] sm:$0xff]
    %v18 = vld [vmem:[%s0 + $0x18] sm:$0xff]
    %v19 = vld [vmem:[%s1] sm:$0xff]
    %v20 = vld [vmem:[%s1 + $0x8] sm:$0xff]
    %v21 = vld [vmem:[%s1 + $0x10] sm:$0xff]
    %v22 = vld [vmem:[%s1 + $0x18] sm:$0xff]
    %v23 = vld [vmem:[%s2] sm:$0xff]
    %v24 = vld [vmem:[%s2 + $0x8] sm:$0xff]
    %v25 = vld [vmem:[%s2 + $0x10] sm:$0xff]
    %v26 = vld [vmem:[%s2 + $0x18] sm:$0xff]
    %v27 = vadd.f32 %v15, %v16
    %v28 = vadd.f32 %v27, %v17
    %v29 = vadd.f32 %v28, %v18
    %v30 = vrot.slane %v29, 4
    %v31 = vadd.f32 %v29, %v30
    %v32 = vrot.slane %v31, 2
    %v33 = vadd.f32 %v31, %v32
    %v34 = vrot.slane %v33, 1
    %v35 = vadd.f32 %v33, %v34
    %v36 = vmul.f32 %v15, %v15
    %v37 = vmul.f32 %v16, %v16
    %v38 = vmul.f32 %v17, %v17
    %v39 = vmul.f32 %v18, %v18
    %v40 = vadd.f32 %v36, %v37
    %v41 = vadd.f32 %v40, %v38
    %v42 = vadd.f32 %v41, %v39
    %v43 = vrot.slane %v42, 4
    %v44 = vadd.f32 %v42, %v43
    %v45 = vrot.slane %v44, 2
    %v46 = vadd.f32 %v44, %v45
    %v47 = vrot.slane %v46, 1
    %v48 = vadd.f32 %v46, %v47
    %v49 = vmul.f32 %v35, 0.03125
    %v50 = vmul.f32 %v35, %v49
    %v51 = vsub.f32 %v48, %v50
    %v52 = vrcp.pop 31.0
    %v53 = vmul.f32 31.0, %v52
    %v54 = vsub.f32 1.0, %v53
    %v55 = vmul.f32 %v52, %v54
    %v56 = vadd.f32 %v52, %v55
    %vm57 = vweird.f32 %v52
    %v58 = vsel %vm57, %v52, %v56
    %v59 = vmul.f32 %v51, %v58
    %v60 = vmax.f32 %v59, 0.0
    %v61 = vrsqrt.pop %v60
    %v62 = vmul.f32 %v61, %v60
    %v63 = vmul.f32 %v62, %v61
    %v64 = vmul.f32 0.5, %v63
    %v65 = vsub.f32 1.5, %v64
    %v66 = vmul.f32 %v61, %v65
    %v67 = vmul.f32 %v60, %v66
    %vm68 = vcmp.eq.f32.partialorder %v60, inf
    %v69 = vsel %vm68, %v60, %v67
    %vm70 = vcmp.eq.f32.partialorder %v60, 0.0
    %v71 = vand.u32 %v60, 2147483648
    %v72 = vsel %vm70, %v71, %v69
    %v73 = vadd.f32 %v72, 1e-06
    %v74 = vrcp.pop %v73
    %v75 = vmul.f32 %v73, %v74
    %v76 = vsub.f32 1.0, %v75
    %v77 = vmul.f32 %v74, %v76
    %v78 = vadd.f32 %v74, %v77
    %vm79 = vweird.f32 %v73
    %vm80 = vweird.f32 %v74
    %vm81 = vmor %vm79, %vm80
    %v82 = vsel %vm81, %v74, %v78
    %v83 = vand.u32 2147483647, %v73
    %vm84 = vcmp.eq.f32.partialorder %v83, 8.507059e+37
    %v85 = vand.u32 %v73, 2147483648
    %v86 = vor.u32 1.1754944e-38, %v85
    %v87 = vsel %vm84, %v86, %v82
    %v88 = vsub.f32 %v15, %v49
    %v89 = vsub.f32 %v16, %v49
    %v90 = vsub.f32 %v17, %v49
    %v91 = vsub.f32 %v18, %v49
    %v92 = vmul.f32 %v88, %v87
    %v93 = vmul.f32 %v89, %v87
    %v94 = vmul.f32 %v90, %v87
    %v95 = vmul.f32 %v91, %v87
    %97 = vset.pattern.permute.xlu0 0
    %98 = vperm.xlu0 %97, %v19
    %v99 = vpop.permute.xlu0 %98
    %102 = vset.pattern.permute.xlu0 0
    %103 = vperm.xlu0 %102, %v20
    %v104 = vpop.permute.xlu0 %103
    %107 = vset.pattern.permute.xlu0 0
    %108 = vperm.xlu0 %107, %v21
    %v109 = vpop.permute.xlu0 %108
    %112 = vset.pattern.permute.xlu0 0
    %113 = vperm.xlu0 %112, %v22
    %v114 = vpop.permute.xlu0 %113
    %v116 = vmul.f32 %v92, %v99
    %v117 = vmul.f32 %v93, %v104
    %v118 = vmul.f32 %v94, %v109
    %v119 = vmul.f32 %v95, %v114
    %121 = vset.pattern.permute.xlu0 0
    %122 = vperm.xlu0 %121, %v23
    %v123 = vpop.permute.xlu0 %122
    %126 = vset.pattern.permute.xlu0 0
    %127 = vperm.xlu0 %126, %v24
    %v128 = vpop.permute.xlu0 %127
    %131 = vset.pattern.permute.xlu0 0
    %132 = vperm.xlu0 %131, %v25
    %v133 = vpop.permute.xlu0 %132
    %136 = vset.pattern.permute.xlu0 0
    %137 = vperm.xlu0 %136, %v26
    %v138 = vpop.permute.xlu0 %137
    %v140 = vadd.f32 %v116, %v123
    %v141 = vadd.f32 %v117, %v128
    %v142 = vadd.f32 %v118, %v133
    %v143 = vadd.f32 %v119, %v138
    %144 = vst [vmem:[#allocation2] sm:$0xff] %v140
    %145 = vst [vmem:[#allocation2 + $0x8] sm:$0xff] %v141
    %146 = vst [vmem:[#allocation2 + $0x10] sm:$0xff] %v142
    %147 = vst [vmem:[#allocation2 + $0x18] sm:$0xff] %v143
    // Predicated region
    $region14: #{tpu_custom_call.1} parent=1 // pred_check
      _
    $region15: #{tpu_custom_call.1} parent=1 // pred_check_branch
      %149 = sbr.rel (0) target = $region17
    $region16: #{tpu_custom_call.1} parent=1 // pred_region
      %151 = vsyncadd [#allocation3], 0
      %s152 = sshll.u32 [#allocation2], 4
      %s153 = int_to_ptr.vmem [resolvable:$true] %s152
      %s154 = sshll.u32 %s3, 4
      %s155 = int_to_ptr.hbm [resolvable:$true] %s154
      %160 = dma.vmem_to_hbm [thread:$0]  %s153, 512, %s155, [#allocation3], 128, 128, 8
    $region17: #{tpu_custom_call.1} parent=1 // pred_fallthru
      _
    // Predicated region
    $region18: #{tpu_custom_call.1} parent=1 // pred_check
      _
    $region19: #{tpu_custom_call.1} parent=1 // pred_check_branch
      %162 = sbr.rel (0) target = $region21
    $region20: #{tpu_custom_call.1} parent=1 // pred_region
      %164 = dma.done [#allocation3], 512
    $region21: #{tpu_custom_call.1} parent=1 // pred_fallthru
      _
    %165 = vsyncpa [#allocation3], 1

</llo_original>
